<compile_context>
chip_gen: v5e
topology: v5e:2x2
jax: 0.10.0
libtpu: 0.0.40
codegen_flags: <defaults>
</compile_context>

<pallas_src>
import functools

import jax
import jax.numpy as jnp
from jax.experimental import pallas as pl
from jax.experimental.pallas import tpu as pltpu

EPS = 1e-5


# ----------------------------- Pallas kernels ------------------------------ #

def _conv_bn_kernel(p_ref, w_ref, b_ref, o_ref, acc_ref, *, relu):
    """One (TM, TN) output tile of (patches @ w_scaled) + bias [+ ReLU]."""
    @pl.when(pl.program_id(2) == 0)
    def _():
        acc_ref[...] = jnp.zeros_like(acc_ref)

    acc_ref[...] += jnp.dot(p_ref[...], w_ref[...],
                            preferred_element_type=jnp.float32)

    @pl.when(pl.program_id(2) == pl.num_programs(2) - 1)
    def _():
        out = acc_ref[...] + b_ref[...]
        if relu:
            out = jnp.maximum(out, 0.0)
        o_ref[...] = out.astype(o_ref.dtype)


def _conv_bn_res_kernel(p_ref, w_ref, b_ref, r_ref, o_ref, acc_ref, *, relu):
    """Same as above, with the residual (shortcut) add fused before ReLU."""
    @pl.when(pl.program_id(2) == 0)
    def _():
        acc_ref[...] = jnp.zeros_like(acc_ref)

    acc_ref[...] += jnp.dot(p_ref[...], w_ref[...],
                            preferred_element_type=jnp.float32)

    @pl.when(pl.program_id(2) == pl.num_programs(2) - 1)
    def _():
        out = acc_ref[...] + b_ref[...] + r_ref[...].astype(jnp.float32)
        if relu:
            out = jnp.maximum(out, 0.0)
        o_ref[...] = out.astype(o_ref.dtype)


# ------------------------------ call wrapper -------------------------------- #

def _round_up(x, m):
    return (x + m - 1) // m * m


def _pad2d(a, rows, cols):
    r, c = a.shape
    if r == rows and c == cols:
        return a
    return jnp.pad(a, ((0, rows - r), (0, cols - c)))


def conv_bn_matmul(patches, w_mat, scale, bias, residual=None, relu=True,
                   out_dtype=jnp.bfloat16, tm=256, tn=256, tk=256):
    """Tiled fused (im2col-conv @ (W*scale)) + bias [+ residual] [+ ReLU]."""
    M, K = patches.shape
    Cout = w_mat.shape[1]

    # Fold the BN scale into the weights (trace time, zero runtime cost);
    # keep the bias in f32 for the epilogue.
    w_scaled = w_mat.astype(jnp.float32) * scale.astype(jnp.float32)[None, :]
    bias2 = bias.reshape(1, Cout).astype(jnp.float32)

    # Tile sizes: lane-dense (multiples of 128) on K and Cout, sublane (8) on M.
    tm = min(tm, _round_up(M, 8))
    tk = min(tk, _round_up(K, 128))
    tn = min(tn, _round_up(Cout, 128))
    Mp, Kp, Np = _round_up(M, tm), _round_up(K, tk), _round_up(Cout, tn)

    # bf16 matmul inputs, f32 MXU accumulation.
    p = _pad2d(patches.astype(jnp.bfloat16), Mp, Kp)
    w = _pad2d(w_scaled.astype(jnp.bfloat16), Kp, Np)
    b = _pad2d(bias2, 1, Np)

    in_specs = [
        pl.BlockSpec((tm, tk), lambda i, j, k: (i, k)),   # patches
        pl.BlockSpec((tk, tn), lambda i, j, k: (k, j)),   # weights (M-independent)
        pl.BlockSpec((1, tn), lambda i, j, k: (0, j)),    # bias
    ]
    args = [p, w, b]
    if residual is None:
        kernel = functools.partial(_conv_bn_kernel, relu=relu)
    else:
        kernel = functools.partial(_conv_bn_res_kernel, relu=relu)
        r = _pad2d(residual.astype(jnp.bfloat16), Mp, Np)
        in_specs.append(pl.BlockSpec((tm, tn), lambda i, j, k: (i, j)))
        args.append(r)

    out = pl.pallas_call(
        kernel,
        out_shape=jax.ShapeDtypeStruct((Mp, Np), out_dtype),
        grid=(Mp // tm, Np // tn, Kp // tk),
        in_specs=in_specs,
        out_specs=pl.BlockSpec((tm, tn), lambda i, j, k: (i, j)),
        scratch_shapes=[pltpu.VMEM((tm, tn), jnp.float32)],
        compiler_params=pltpu.CompilerParams(
            dimension_semantics=("parallel", "parallel", "arbitrary"),
            vmem_limit_bytes=32 * 1024 * 1024),
    )(*args)
    return out[:M, :Cout]


# ------------------------------- JAX glue ---------------------------------- #

def im2col(x_nhwc, k, stride, pad):
    """x: [N, H, W, C] -> patches [N*Ho*Wo, k*k*C] (tap-major, channel-minor)."""
    x = jnp.pad(x_nhwc, ((0, 0), (pad, pad), (pad, pad), (0, 0)))
    N, Hp, Wp, C = x.shape
    Ho = (Hp - k) // stride + 1
    Wo = (Wp - k) // stride + 1
    taps = []
    for ky in range(k):
        for kx in range(k):
            taps.append(x[:, ky:ky + stride * Ho:stride,
                          kx:kx + stride * Wo:stride, :])
    p = jnp.concatenate(taps, axis=-1)  # [N, Ho, Wo, k*k*C]
    return p.reshape(N * Ho * Wo, k * k * C), (N, Ho, Wo)


def weight_to_mat(w_oihw):
    """PyTorch conv weight [Cout, Cin, kh, kw] -> [kh*kw*Cin, Cout]."""
    Cout, Cin, kh, kw = w_oihw.shape
    return jnp.transpose(w_oihw, (2, 3, 1, 0)).reshape(kh * kw * Cin, Cout)


def fold_bn(bn):
    gamma, beta, mean, var = bn
    scale = gamma / jnp.sqrt(var + EPS)
    bias = beta - mean * scale
    return scale, bias


def basic_block_forward_nhwc(x_nhwc, params, stride):
    """BasicBlock.forward on NHWC bf16 activations (Pallas kernels inside)."""
    x = x_nhwc.astype(jnp.bfloat16)
    N, H, W, Cin = x.shape
    Cout = params["conv1_w"].shape[0]

    # conv1 (3x3, stride, pad=1) + bn1 + ReLU
    p1, (_, Ho, Wo) = im2col(x, 3, stride, 1)
    s1, b1 = fold_bn(params["bn1"])
    h1 = conv_bn_matmul(p1, weight_to_mat(params["conv1_w"]), s1, b1, relu=True)
    h1_img = h1.reshape(N, Ho, Wo, Cout)

    # shortcut: 1x1 conv (stride) + bn when shape changes, identity otherwise
    if stride != 1 or Cin != Cout:
        ps, _ = im2col(x, 1, stride, 0)
        ss, bs = fold_bn(params["bns"])
        shortcut = conv_bn_matmul(ps, weight_to_mat(params["convs_w"]),
                                  ss, bs, relu=False)
    else:
        shortcut = x.reshape(N * H * W, Cin)

    # conv2 (3x3, stride=1, pad=1) + bn2 + residual add + ReLU (fused epilogue)
    p2, _ = im2col(h1_img, 3, 1, 1)
    s2, b2 = fold_bn(params["bn2"])
    out = conv_bn_matmul(p2, weight_to_mat(params["conv2_w"]), s2, b2,
                         residual=shortcut, relu=True)
    return out.reshape(N, Ho, Wo, Cout)


def basic_block_forward(x_nchw, params, stride):
    """NCHW wrapper matching the PyTorch module interface.

    In a full network, call basic_block_forward_nhwc directly so the
    NCHW<->NHWC transposes happen once per network, not per block.
    """
    x = jnp.transpose(x_nchw, (0, 2, 3, 1))                 # -> NHWC
    out = basic_block_forward_nhwc(x, params, stride)
    return jnp.transpose(out, (0, 3, 1, 2)).astype(x_nchw.dtype)  # -> NCHW


# --------------------------- pure-JAX reference ----------------------------- #

def _ref_conv(x, w, stride, pad):
    return jax.lax.conv_general_dilated(
        x, w, (stride, stride), ((pad, pad), (pad, pad)),
        dimension_numbers=("NCHW", "OIHW", "NCHW"))


def _ref_bn(x, bn):
    g, b, m, v = (p[None, :, None, None] for p in bn)
    return (x - m) / jnp.sqrt(v + EPS) * g + b


def reference_forward(x, params, stride):
    out = jax.nn.relu(_ref_bn(_ref_conv(x, params["conv1_w"], stride, 1),
                              params["bn1"]))
    out = _ref_bn(_ref_conv(out, params["conv2_w"], 1, 1), params["bn2"])
    if stride != 1 or params["conv1_w"].shape[1] != params["conv1_w"].shape[0]:
        sc = _ref_bn(_ref_conv(x, params["convs_w"], stride, 0), params["bns"])
    else:
        sc = x
    return jax.nn.relu(out + sc)


# --------------------------------- main ------------------------------------- #

def make_params(key, in_planes, planes, stride):
    ks = jax.random.split(key, 12)

    def bn_params(k0, k1, k2, k3, c):
        return (1.0 + 0.1 * jax.random.normal(k0, (c,), jnp.float32),
                0.1 * jax.random.normal(k1, (c,), jnp.float32),
                0.05 * jax.random.normal(k2, (c,), jnp.float32),
                0.5 + 0.1 * jnp.abs(jax.random.normal(k3, (c,), jnp.float32)))

    params = {
        "conv1_w": 0.1 * jax.random.normal(ks[0], (planes, in_planes, 3, 3),
                                           jnp.float32),
        "bn1": bn_params(ks[1], ks[2], ks[3], ks[4], planes),
        "conv2_w": 0.1 * jax.random.normal(ks[5], (planes, planes, 3, 3),
                                           jnp.float32),
        "bn2": bn_params(ks[6], ks[7], ks[8], ks[9], planes),
    }
    if stride != 1 or in_planes != planes:
        params["convs_w"] = 0.1 * jax.random.normal(
            ks[10], (planes, in_planes, 1, 1), jnp.float32)
        params["bns"] = bn_params(*jax.random.split(ks[11], 4), planes)
    return params


if __name__ == "__main__":
    key = jax.random.PRNGKey(0)
    k_x, k_p = jax.random.split(key)

    N, in_planes, planes, H, W, stride = 2, 4, 8, 16, 16, 2
    x = jax.random.normal(k_x, (N, in_planes, H, W), jnp.float32)  # NCHW
    params = make_params(k_p, in_planes, planes, stride)

    fwd = jax.jit(functools.partial(basic_block_forward, stride=stride))
    out = jax.block_until_ready(fwd(x, params))

    ref = jax.block_until_ready(reference_forward(x, params, stride))
    assert out.shape == ref.shape == (N, planes, (H - 1) // stride + 1,
                                      (W - 1) // stride + 1)
    # bf16 activations/weights -> relaxed tolerance vs. the f32 reference.
    out_f32 = out.astype(jnp.float32)
    assert jnp.allclose(out_f32, ref, atol=5e-2, rtol=5e-2), \
        float(jnp.max(jnp.abs(out_f32 - ref)))

    print("KERNEL_OK")
</pallas_src>

<mosaic_0001>
module attributes {stable_mosaic.version = 11 : i64} {
  func.func @_conv_bn_kernel(%arg0: i32, %arg1: i32, %arg2: i32, %arg3: memref<128x128xbf16, #tpu.memory_space<vmem>>, %arg4: memref<128x128xbf16, #tpu.memory_space<vmem>>, %arg5: memref<1x128xf32, #tpu.memory_space<vmem>>, %arg6: memref<128x128xbf16, #tpu.memory_space<vmem>>, %arg7: memref<128x128xf32, #tpu.memory_space<vmem>>) attributes {dimension_semantics = [#tpu.dimension_semantics<parallel>, #tpu.dimension_semantics<parallel>, #tpu.dimension_semantics<arbitrary>], iteration_bounds = array<i64: 1, 1, 1>, scalar_prefetch = 0 : i64, scratch_operands = 1 : i64, tpu.core_type = #tpu.core_type<tc>, window_params = [{transform_indices = @transform_0, window_bounds = array<i64: 128, 128>}, {transform_indices = @transform_1, window_bounds = array<i64: 128, 128>}, {transform_indices = @transform_2, window_bounds = array<i64: 1, 128>}, {transform_indices = @transform_3, window_bounds = array<i64: 128, 128>}]} {
    %c0_i32 = arith.constant 0 : i32
    %0 = arith.cmpi eq, %arg2, %c0_i32 : i32
    %1 = arith.extui %0 : i1 to i32
    %c0_i32_0 = arith.constant 0 : i32
    %2 = arith.cmpi ne, %1, %c0_i32_0 : i32
    scf.if %2 {
      %cst_10 = arith.constant 0.000000e+00 : f32
      %12 = vector.broadcast %cst_10 : f32 to vector<128x128xf32>
      %c0_11 = arith.constant 0 : index
      %c0_12 = arith.constant 0 : index
      %13 = vector.load %arg7[%c0_11, %c0_12] : memref<128x128xf32, #tpu.memory_space<vmem>>, vector<128x128xf32>
      tpu.vector_store %arg7[%c0_11, %c0_12], %12 {strides = array<i32>} : memref<128x128xf32, #tpu.memory_space<vmem>>, vector<128x128xf32>,
    } else {
    }
    %c0 = arith.constant 0 : index
    %c0_1 = arith.constant 0 : index
    %3 = vector.load %arg7[%c0, %c0_1] : memref<128x128xf32, #tpu.memory_space<vmem>>, vector<128x128xf32>
    %c0_2 = arith.constant 0 : index
    %c0_3 = arith.constant 0 : index
    %4 = vector.load %arg3[%c0_2, %c0_3] : memref<128x128xbf16, #tpu.memory_space<vmem>>, vector<128x128xbf16>
    %c0_4 = arith.constant 0 : index
    %c0_5 = arith.constant 0 : index
    %5 = vector.load %arg4[%c0_4, %c0_5] : memref<128x128xbf16, #tpu.memory_space<vmem>>, vector<128x128xbf16>
    %cst = arith.constant dense<0.000000e+00> : vector<128x128xf32>
    %6 = tpu.matmul %4, %5, %cst {dimension_numbers = #tpu.dot_dimension_numbers<[1], [0], [0], [1], [0, 0, 1, 1], [], []>} : vector<128x128xbf16>, vector<128x128xbf16>, vector<128x128xf32> -> vector<128x128xf32>
    %7 = arith.addf %3, %6 : vector<128x128xf32>
    %c0_6 = arith.constant 0 : index
    %c0_7 = arith.constant 0 : index
    %8 = vector.load %arg7[%c0_6, %c0_7] : memref<128x128xf32, #tpu.memory_space<vmem>>, vector<128x128xf32>
    tpu.vector_store %arg7[%c0_6, %c0_7], %7 {strides = array<i32>} : memref<128x128xf32, #tpu.memory_space<vmem>>, vector<128x128xf32>,
    %c0_i32_8 = arith.constant 0 : i32
    %9 = arith.cmpi eq, %arg2, %c0_i32_8 : i32
    %10 = arith.extui %9 : i1 to i32
    %c0_i32_9 = arith.constant 0 : i32
    %11 = arith.cmpi ne, %10, %c0_i32_9 : i32
    scf.if %11 {
      %c0_10 = arith.constant 0 : index
      %c0_11 = arith.constant 0 : index
      %12 = vector.load %arg7[%c0_10, %c0_11] : memref<128x128xf32, #tpu.memory_space<vmem>>, vector<128x128xf32>
      %c0_12 = arith.constant 0 : index
      %c0_13 = arith.constant 0 : index
      %13 = vector.load %arg5[%c0_12, %c0_13] : memref<1x128xf32, #tpu.memory_space<vmem>>, vector<1x128xf32>
      %14 = vector.broadcast %13 : vector<1x128xf32> to vector<128x128xf32>
      %15 = arith.addf %12, %14 : vector<128x128xf32>
      %cst_14 = arith.constant 0.000000e+00 : f32
      %16 = vector.broadcast %cst_14 : f32 to vector<128x128xf32>
      %17 = arith.maximumf %15, %16 : vector<128x128xf32>
      %18 = arith.truncf %17 : vector<128x128xf32> to vector<128x128xbf16>
      %c0_15 = arith.constant 0 : index
      %c0_16 = arith.constant 0 : index
      %19 = vector.load %arg6[%c0_15, %c0_16] : memref<128x128xbf16, #tpu.memory_space<vmem>>, vector<128x128xbf16>
      tpu.vector_store %arg6[%c0_15, %c0_16], %18 {strides = array<i32>} : memref<128x128xbf16, #tpu.memory_space<vmem>>, vector<128x128xbf16>,
    } else {
    }
    return
  }
  func.func @transform_0(%arg0: i32, %arg1: i32, %arg2: i32) -> (i32, i32) {
    %c0_i32 = arith.constant 0 : i32
    return %arg0, %arg2 : i32, i32
  }
  func.func @transform_1(%arg0: i32, %arg1: i32, %arg2: i32) -> (i32, i32) {
    %c0_i32 = arith.constant 0 : i32
    return %arg2, %arg1 : i32, i32
  }
  func.func @transform_2(%arg0: i32, %arg1: i32, %arg2: i32) -> (i32, i32) {
    %c0_i32 = arith.constant 0 : i32
    %c0_i32_0 = arith.constant 0 : i32
    return %c0_i32, %arg1 : i32, i32
  }
  func.func @transform_3(%arg0: i32, %arg1: i32, %arg2: i32) -> (i32, i32) {
    %c0_i32 = arith.constant 0 : i32
    return %arg0, %arg1 : i32, i32
  }
}

module attributes {stable_mosaic.version = 11 : i64} {
  func.func @_conv_bn_kernel(%arg0: i32, %arg1: i32, %arg2: i32, %arg3: memref<128x128xbf16, #tpu.memory_space<vmem>>, %arg4: memref<128x128xbf16, #tpu.memory_space<vmem>>, %arg5: memref<1x128xf32, #tpu.memory_space<vmem>>, %arg6: memref<128x128xbf16, #tpu.memory_space<vmem>>, %arg7: memref<128x128xf32, #tpu.memory_space<vmem>>) attributes {dimension_semantics = [#tpu.dimension_semantics<parallel>, #tpu.dimension_semantics<parallel>, #tpu.dimension_semantics<arbitrary>], iteration_bounds = array<i64: 1, 1, 1>, scalar_prefetch = 0 : i64, scratch_operands = 1 : i64, tpu.core_type = #tpu.core_type<tc>, window_params = [{transform_indices = @transform_0, window_bounds = array<i64: 128, 128>}, {transform_indices = @transform_1, window_bounds = array<i64: 128, 128>}, {transform_indices = @transform_2, window_bounds = array<i64: 1, 128>}, {transform_indices = @transform_3, window_bounds = array<i64: 128, 128>}]} {
    %c0_i32 = arith.constant 0 : i32
    %0 = arith.cmpi eq, %arg2, %c0_i32 : i32
    %1 = arith.extui %0 : i1 to i32
    %c0_i32_0 = arith.constant 0 : i32
    %2 = arith.cmpi ne, %1, %c0_i32_0 : i32
    scf.if %2 {
      %cst_10 = arith.constant 0.000000e+00 : f32
      %12 = vector.broadcast %cst_10 : f32 to vector<128x128xf32>
      %c0_11 = arith.constant 0 : index
      %c0_12 = arith.constant 0 : index
      %13 = vector.load %arg7[%c0_11, %c0_12] : memref<128x128xf32, #tpu.memory_space<vmem>>, vector<128x128xf32>
      tpu.vector_store %arg7[%c0_11, %c0_12], %12 {strides = array<i32>} : memref<128x128xf32, #tpu.memory_space<vmem>>, vector<128x128xf32>,
    } else {
    }
    %c0 = arith.constant 0 : index
    %c0_1 = arith.constant 0 : index
    %3 = vector.load %arg7[%c0, %c0_1] : memref<128x128xf32, #tpu.memory_space<vmem>>, vector<128x128xf32>
    %c0_2 = arith.constant 0 : index
    %c0_3 = arith.constant 0 : index
    %4 = vector.load %arg3[%c0_2, %c0_3] : memref<128x128xbf16, #tpu.memory_space<vmem>>, vector<128x128xbf16>
    %c0_4 = arith.constant 0 : index
    %c0_5 = arith.constant 0 : index
    %5 = vector.load %arg4[%c0_4, %c0_5] : memref<128x128xbf16, #tpu.memory_space<vmem>>, vector<128x128xbf16>
    %cst = arith.constant dense<0.000000e+00> : vector<128x128xf32>
    %6 = tpu.matmul %4, %5, %cst {dimension_numbers = #tpu.dot_dimension_numbers<[1], [0], [0], [1], [0, 0, 1, 1], [], []>} : vector<128x128xbf16>, vector<128x128xbf16>, vector<128x128xf32> -> vector<128x128xf32>
    %7 = arith.addf %3, %6 : vector<128x128xf32>
    %c0_6 = arith.constant 0 : index
    %c0_7 = arith.constant 0 : index
    %8 = vector.load %arg7[%c0_6, %c0_7] : memref<128x128xf32, #tpu.memory_space<vmem>>, vector<128x128xf32>
    tpu.vector_store %arg7[%c0_6, %c0_7], %7 {strides = array<i32>} : memref<128x128xf32, #tpu.memory_space<vmem>>, vector<128x128xf32>,
    %c0_i32_8 = arith.constant 0 : i32
    %9 = arith.cmpi eq, %arg2, %c0_i32_8 : i32
    %10 = arith.extui %9 : i1 to i32
    %c0_i32_9 = arith.constant 0 : i32
    %11 = arith.cmpi ne, %10, %c0_i32_9 : i32
    scf.if %11 {
      %c0_10 = arith.constant 0 : index
      %c0_11 = arith.constant 0 : index
      %12 = vector.load %arg7[%c0_10, %c0_11] : memref<128x128xf32, #tpu.memory_space<vmem>>, vector<128x128xf32>
      %c0_12 = arith.constant 0 : index
      %c0_13 = arith.constant 0 : index
      %13 = vector.load %arg5[%c0_12, %c0_13] : memref<1x128xf32, #tpu.memory_space<vmem>>, vector<1x128xf32>
      %14 = vector.broadcast %13 : vector<1x128xf32> to vector<128x128xf32>
      %15 = arith.addf %12, %14 : vector<128x128xf32>
      %16 = arith.truncf %15 : vector<128x128xf32> to vector<128x128xbf16>
      %c0_14 = arith.constant 0 : index
      %c0_15 = arith.constant 0 : index
      %17 = vector.load %arg6[%c0_14, %c0_15] : memref<128x128xbf16, #tpu.memory_space<vmem>>, vector<128x128xbf16>
      tpu.vector_store %arg6[%c0_14, %c0_15], %16 {strides = array<i32>} : memref<128x128xbf16, #tpu.memory_space<vmem>>, vector<128x128xbf16>,
    } else {
    }
    return
  }
  func.func @transform_0(%arg0: i32, %arg1: i32, %arg2: i32) -> (i32, i32) {
    %c0_i32 = arith.constant 0 : i32
    return %arg0, %arg2 : i32, i32
  }
  func.func @transform_1(%arg0: i32, %arg1: i32, %arg2: i32) -> (i32, i32) {
    %c0_i32 = arith.constant 0 : i32
    return %arg2, %arg1 : i32, i32
  }
  func.func @transform_2(%arg0: i32, %arg1: i32, %arg2: i32) -> (i32, i32) {
    %c0_i32 = arith.constant 0 : i32
    %c0_i32_0 = arith.constant 0 : i32
    return %c0_i32, %arg1 : i32, i32
  }
  func.func @transform_3(%arg0: i32, %arg1: i32, %arg2: i32) -> (i32, i32) {
    %c0_i32 = arith.constant 0 : i32
    return %arg0, %arg1 : i32, i32
  }
}

module attributes {stable_mosaic.version = 11 : i64} {
  func.func @_conv_bn_res_kernel(%arg0: i32, %arg1: i32, %arg2: i32, %arg3: memref<128x128xbf16, #tpu.memory_space<vmem>>, %arg4: memref<128x128xbf16, #tpu.memory_space<vmem>>, %arg5: memref<1x128xf32, #tpu.memory_space<vmem>>, %arg6: memref<128x128xbf16, #tpu.memory_space<vmem>>, %arg7: memref<128x128xbf16, #tpu.memory_space<vmem>>, %arg8: memref<128x128xf32, #tpu.memory_space<vmem>>) attributes {dimension_semantics = [#tpu.dimension_semantics<parallel>, #tpu.dimension_semantics<parallel>, #tpu.dimension_semantics<arbitrary>], iteration_bounds = array<i64: 1, 1, 1>, scalar_prefetch = 0 : i64, scratch_operands = 1 : i64, tpu.core_type = #tpu.core_type<tc>, window_params = [{transform_indices = @transform_0, window_bounds = array<i64: 128, 128>}, {transform_indices = @transform_1, window_bounds = array<i64: 128, 128>}, {transform_indices = @transform_2, window_bounds = array<i64: 1, 128>}, {transform_indices = @transform_3, window_bounds = array<i64: 128, 128>}, {transform_indices = @transform_4, window_bounds = array<i64: 128, 128>}]} {
    %c0_i32 = arith.constant 0 : i32
    %0 = arith.cmpi eq, %arg2, %c0_i32 : i32
    %1 = arith.extui %0 : i1 to i32
    %c0_i32_0 = arith.constant 0 : i32
    %2 = arith.cmpi ne, %1, %c0_i32_0 : i32
    scf.if %2 {
      %cst_10 = arith.constant 0.000000e+00 : f32
      %12 = vector.broadcast %cst_10 : f32 to vector<128x128xf32>
      %c0_11 = arith.constant 0 : index
      %c0_12 = arith.constant 0 : index
      %13 = vector.load %arg8[%c0_11, %c0_12] : memref<128x128xf32, #tpu.memory_space<vmem>>, vector<128x128xf32>
      tpu.vector_store %arg8[%c0_11, %c0_12], %12 {strides = array<i32>} : memref<128x128xf32, #tpu.memory_space<vmem>>, vector<128x128xf32>,
    } else {
    }
    %c0 = arith.constant 0 : index
    %c0_1 = arith.constant 0 : index
    %3 = vector.load %arg8[%c0, %c0_1] : memref<128x128xf32, #tpu.memory_space<vmem>>, vector<128x128xf32>
    %c0_2 = arith.constant 0 : index
    %c0_3 = arith.constant 0 : index
    %4 = vector.load %arg3[%c0_2, %c0_3] : memref<128x128xbf16, #tpu.memory_space<vmem>>, vector<128x128xbf16>
    %c0_4 = arith.constant 0 : index
    %c0_5 = arith.constant 0 : index
    %5 = vector.load %arg4[%c0_4, %c0_5] : memref<128x128xbf16, #tpu.memory_space<vmem>>, vector<128x128xbf16>
    %cst = arith.constant dense<0.000000e+00> : vector<128x128xf32>
    %6 = tpu.matmul %4, %5, %cst {dimension_numbers = #tpu.dot_dimension_numbers<[1], [0], [0], [1], [0, 0, 1, 1], [], []>} : vector<128x128xbf16>, vector<128x128xbf16>, vector<128x128xf32> -> vector<128x128xf32>
    %7 = arith.addf %3, %6 : vector<128x128xf32>
    %c0_6 = arith.constant 0 : index
    %c0_7 = arith.constant 0 : index
    %8 = vector.load %arg8[%c0_6, %c0_7] : memref<128x128xf32, #tpu.memory_space<vmem>>, vector<128x128xf32>
    tpu.vector_store %arg8[%c0_6, %c0_7], %7 {strides = array<i32>} : memref<128x128xf32, #tpu.memory_space<vmem>>, vector<128x128xf32>,
    %c0_i32_8 = arith.constant 0 : i32
    %9 = arith.cmpi eq, %arg2, %c0_i32_8 : i32
    %10 = arith.extui %9 : i1 to i32
    %c0_i32_9 = arith.constant 0 : i32
    %11 = arith.cmpi ne, %10, %c0_i32_9 : i32
    scf.if %11 {
      %c0_10 = arith.constant 0 : index
      %c0_11 = arith.constant 0 : index
      %12 = vector.load %arg8[%c0_10, %c0_11] : memref<128x128xf32, #tpu.memory_space<vmem>>, vector<128x128xf32>
      %c0_12 = arith.constant 0 : index
      %c0_13 = arith.constant 0 : index
      %13 = vector.load %arg5[%c0_12, %c0_13] : memref<1x128xf32, #tpu.memory_space<vmem>>, vector<1x128xf32>
      %14 = vector.broadcast %13 : vector<1x128xf32> to vector<128x128xf32>
      %15 = arith.addf %12, %14 : vector<128x128xf32>
      %c0_14 = arith.constant 0 : index
      %c0_15 = arith.constant 0 : index
      %16 = vector.load %arg6[%c0_14, %c0_15] : memref<128x128xbf16, #tpu.memory_space<vmem>>, vector<128x128xbf16>
      %17 = arith.extf %16 : vector<128x128xbf16> to vector<128x128xf32>
      %18 = arith.addf %15, %17 : vector<128x128xf32>
      %cst_16 = arith.constant 0.000000e+00 : f32
      %19 = vector.broadcast %cst_16 : f32 to vector<128x128xf32>
      %20 = arith.maximumf %18, %19 : vector<128x128xf32>
      %21 = arith.truncf %20 : vector<128x128xf32> to vector<128x128xbf16>
      %c0_17 = arith.constant 0 : index
      %c0_18 = arith.constant 0 : index
      %22 = vector.load %arg7[%c0_17, %c0_18] : memref<128x128xbf16, #tpu.memory_space<vmem>>, vector<128x128xbf16>
      tpu.vector_store %arg7[%c0_17, %c0_18], %21 {strides = array<i32>} : memref<128x128xbf16, #tpu.memory_space<vmem>>, vector<128x128xbf16>,
    } else {
    }
    return
  }
  func.func @transform_0(%arg0: i32, %arg1: i32, %arg2: i32) -> (i32, i32) {
    %c0_i32 = arith.constant 0 : i32
    return %arg0, %arg2 : i32, i32
  }
  func.func @transform_1(%arg0: i32, %arg1: i32, %arg2: i32) -> (i32, i32) {
    %c0_i32 = arith.constant 0 : i32
    return %arg2, %arg1 : i32, i32
  }
  func.func @transform_2(%arg0: i32, %arg1: i32, %arg2: i32) -> (i32, i32) {
    %c0_i32 = arith.constant 0 : i32
    %c0_i32_0 = arith.constant 0 : i32
    return %c0_i32, %arg1 : i32, i32
  }
  func.func @transform_3(%arg0: i32, %arg1: i32, %arg2: i32) -> (i32, i32) {
    %c0_i32 = arith.constant 0 : i32
    return %arg0, %arg1 : i32, i32
  }
  func.func @transform_4(%arg0: i32, %arg1: i32, %arg2: i32) -> (i32, i32) {
    %c0_i32 = arith.constant 0 : i32
    return %arg0, %arg1 : i32, i32
  }
}

</mosaic_0001>

<llo_original>
// kernel: basic_block_forward.3
$region0: #{basic_block_forward.3}
  #allocation0 [shape = 'u32[]', space=smem, size = 0x4, offset = 0x4, fixed_abs, tag = 'smem constant byte address 0x4 - core index']
  #allocation1 [shape = 'u32[72,128]{1,0:T(1,128)}', space=vmem, size = 0x9000, scoped, tag = 'internal scratch']
  #allocation2 [shape = 'f32[128,128]{1,0:T(8,128)}', space=vmem, size = 0x10000, scoped, tag = 'scratch operand']
  %s0 = inlined_call_operand.vmem [shape: bf16[128,128], index: 0, kind: input, shape index: {}]
  %s1 = inlined_call_operand.vmem [shape: bf16[128,128], index: 1, kind: input, shape index: {}]
  %s2 = inlined_call_operand.vmem [shape: f32[1,128], index: 2, kind: input, shape index: {}]
  %s3 = inlined_call_operand.vmem [shape: bf16[128,128], index: 3, kind: output, shape index: {}]
  %s4 = sld [smem:[#allocation0]]
  $region30: #{basic_block_forward.3} parent=0
    _
  %s6 = ssub.s32 1, %s4
  %s7 = scalar_select 0, %s6, %s4
  // Predicated region
  $region2: #{basic_block_forward.3} parent=0 // pred_check
    _
  $region3: #{basic_block_forward.3} parent=0 // pred_check_branch
    %9 = sbr.rel (0) target = $region5
  $region4: #{basic_block_forward.3} parent=0 // pred_region
    _
  $region5: #{basic_block_forward.3} parent=0 // pred_fallthru
    _
  // Predicated region
  $region6: #{basic_block_forward.3} parent=0 // pred_check
    _
  $region7: #{basic_block_forward.3} parent=0 // pred_check_branch
    %11 = sbr.rel (0) target = $region9
  $region8: #{basic_block_forward.3} parent=0 // pred_region
    _
  $region9: #{basic_block_forward.3} parent=0 // pred_fallthru
    _
  // Predicated region
  $region10: #{basic_block_forward.3} parent=0 // pred_check
    _
  $region11: #{basic_block_forward.3} parent=0 // pred_check_branch
    %13 = sbr.rel (0) target = $region13
  $region12: #{basic_block_forward.3} parent=0 // pred_region
    _
  $region13: #{basic_block_forward.3} parent=0 // pred_fallthru
    _
  %p14 = scmp.eq.s32.totalorder 0, 0
  // Predicated region
  $region14: #{basic_block_forward.3} parent=0 // pred_check
    %p15 = pneg %p14
  $region15: #{basic_block_forward.3} parent=0 // pred_check_branch
    %17 = sbr.rel (%p15) target = $region17
  $region16: #{basic_block_forward.3} parent=0 // pred_region
    %18 = vst [vmem:[#allocation2] sm:$0xff] 0.0
    %19 = vst [vmem:[#allocation2 + $0x8] sm:$0xff] 0.0
    %20 = vst [vmem:[#allocation2 + $0x10] sm:$0xff] 0.0
    %21 = vst [vmem:[#allocation2 + $0x18] sm:$0xff] 0.0
    %22 = vst [vmem:[#allocation2 + $0x20] sm:$0xff] 0.0
    %23 = vst [vmem:[#allocation2 + $0x28] sm:$0xff] 0.0
    %24 = vst [vmem:[#allocation2 + $0x30] sm:$0xff] 0.0
    %25 = vst [vmem:[#allocation2 + $0x38] sm:$0xff] 0.0
    %26 = vst [vmem:[#allocation2 + $0x40] sm:$0xff] 0.0
    %27 = vst [vmem:[#allocation2 + $0x48] sm:$0xff] 0.0
    %28 = vst [vmem:[#allocation2 + $0x50] sm:$0xff] 0.0
    %29 = vst [vmem:[#allocation2 + $0x58] sm:$0xff] 0.0
    %30 = vst [vmem:[#allocation2 + $0x60] sm:$0xff] 0.0
    %31 = vst [vmem:[#allocation2 + $0x68] sm:$0xff] 0.0
    %32 = vst [vmem:[#allocation2 + $0x70] sm:$0xff] 0.0
    %33 = vst [vmem:[#allocation2 + $0x78] sm:$0xff] 0.0
  $region17: #{basic_block_forward.3} parent=0 // pred_fallthru
    _
  %v34 = vld [vmem:[#allocation2] sm:$0xff]
  %v35 = vld [vmem:[#allocation2 + $0x8] sm:$0xff]
  %v36 = vld [vmem:[#allocation2 + $0x10] sm:$0xff]
  %v37 = vld [vmem:[#allocation2 + $0x18] sm:$0xff]
  %v38 = vld [vmem:[#allocation2 + $0x20] sm:$0xff]
  %v39 = vld [vmem:[#allocation2 + $0x28] sm:$0xff]
  %v40 = vld [vmem:[#allocation2 + $0x30] sm:$0xff]
  %v41 = vld [vmem:[#allocation2 + $0x38] sm:$0xff]
  %v42 = vld [vmem:[#allocation2 + $0x40] sm:$0xff]
  %v43 = vld [vmem:[#allocation2 + $0x48] sm:$0xff]
  %v44 = vld [vmem:[#allocation2 + $0x50] sm:$0xff]
  %v45 = vld [vmem:[#allocation2 + $0x58] sm:$0xff]
  %v46 = vld [vmem:[#allocation2 + $0x60] sm:$0xff]
  %v47 = vld [vmem:[#allocation2 + $0x68] sm:$0xff]
  %v48 = vld [vmem:[#allocation2 + $0x70] sm:$0xff]
  %v49 = vld [vmem:[#allocation2 + $0x78] sm:$0xff]
  %v50 = vld [vmem:[%s0] sm:$0xf]
  %v51 = vld [vmem:[%s0 + $0x4] sm:$0xf]
  %v52 = vld [vmem:[%s0 + $0x8] sm:$0xf]
  %v53 = vld [vmem:[%s0 + $0xc] sm:$0xf]
  %v54 = vld [vmem:[%s0 + $0x10] sm:$0xf]
  %v55 = vld [vmem:[%s0 + $0x14] sm:$0xf]
  %v56 = vld [vmem:[%s0 + $0x18] sm:$0xf]
  %v57 = vld [vmem:[%s0 + $0x1c] sm:$0xf]
  %v58 = vld [vmem:[%s0 + $0x20] sm:$0xf]
  %v59 = vld [vmem:[%s0 + $0x24] sm:$0xf]
  %v60 = vld [vmem:[%s0 + $0x28] sm:$0xf]
  %v61 = vld [vmem:[%s0 + $0x2c] sm:$0xf]
  %v62 = vld [vmem:[%s0 + $0x30] sm:$0xf]
  %v63 = vld [vmem:[%s0 + $0x34] sm:$0xf]
  %v64 = vld [vmem:[%s0 + $0x38] sm:$0xf]
  %v65 = vld [vmem:[%s0 + $0x3c] sm:$0xf]
  %v66 = vld [vmem:[%s1] sm:$0xf]
  %v67 = vld [vmem:[%s1 + $0x4] sm:$0xf]
  %v68 = vld [vmem:[%s1 + $0x8] sm:$0xf]
  %v69 = vld [vmem:[%s1 + $0xc] sm:$0xf]
  %v70 = vld [vmem:[%s1 + $0x10] sm:$0xf]
  %v71 = vld [vmem:[%s1 + $0x14] sm:$0xf]
  %v72 = vld [vmem:[%s1 + $0x18] sm:$0xf]
  %v73 = vld [vmem:[%s1 + $0x1c] sm:$0xf]
  %v74 = vld [vmem:[%s1 + $0x20] sm:$0xf]
  %v75 = vld [vmem:[%s1 + $0x24] sm:$0xf]
  %v76 = vld [vmem:[%s1 + $0x28] sm:$0xf]
  %v77 = vld [vmem:[%s1 + $0x2c] sm:$0xf]
  %v78 = vld [vmem:[%s1 + $0x30] sm:$0xf]
  %v79 = vld [vmem:[%s1 + $0x34] sm:$0xf]
  %v80 = vld [vmem:[%s1 + $0x38] sm:$0xf]
  %v81 = vld [vmem:[%s1 + $0x3c] sm:$0xf]
  %v98 = vunpack.c.l.b16 %v50
  %v99 = vunpack.c.l.b16 %v51
  %v100 = vunpack.c.l.b16 %v52
  %v101 = vunpack.c.l.b16 %v53
  %v102 = vunpack.c.l.b16 %v54
  %v103 = vunpack.c.l.b16 %v55
  %v104 = vunpack.c.l.b16 %v56
  %v105 = vunpack.c.l.b16 %v57
  %v106 = vunpack.c.l.b16 %v58
  %v107 = vunpack.c.l.b16 %v59
  %v108 = vunpack.c.l.b16 %v60
  %v109 = vunpack.c.l.b16 %v61
  %v110 = vunpack.c.l.b16 %v62
  %v111 = vunpack.c.l.b16 %v63
  %v112 = vunpack.c.l.b16 %v64
  %v113 = vunpack.c.l.b16 %v65
  %v114 = vpack.c.b16 %v99, %v98
  %v115 = vpack.c.b16 %v101, %v100
  %v116 = vpack.c.b16 %v103, %v102
  %v117 = vpack.c.b16 %v105, %v104
  %v118 = vpack.c.b16 %v107, %v106
  %v119 = vpack.c.b16 %v109, %v108
  %v120 = vpack.c.b16 %v111, %v110
  %v121 = vpack.c.b16 %v113, %v112
  %v146 = vunpack.c.l.b16 %v66
  %v147 = vunpack.c.l.b16 %v67
  %v148 = vunpack.c.l.b16 %v68
  %v149 = vunpack.c.l.b16 %v69
  %v150 = vunpack.c.l.b16 %v70
  %v151 = vunpack.c.l.b16 %v71
  %v152 = vunpack.c.l.b16 %v72
  %v153 = vunpack.c.l.b16 %v73
  %v154 = vunpack.c.l.b16 %v74
  %v155 = vunpack.c.l.b16 %v75
  %v156 = vunpack.c.l.b16 %v76
  %v157 = vunpack.c.l.b16 %v77
  %v158 = vunpack.c.l.b16 %v78
  %v159 = vunpack.c.l.b16 %v79
  %v160 = vunpack.c.l.b16 %v80
  %v161 = vunpack.c.l.b16 %v81
  %v162 = vpack.c.b16 %v147, %v146
  %v163 = vpack.c.b16 %v149, %v148
  %v164 = vpack.c.b16 %v151, %v150
  %v165 = vpack.c.b16 %v153, %v152
  %v166 = vpack.c.b16 %v155, %v154
  %v167 = vpack.c.b16 %v157, %v156
  %v168 = vpack.c.b16 %v159, %v158
  %v169 = vpack.c.b16 %v161, %v160
  %178 = vmatpush.bf16.msra.mxu0 %v169
  %179 = vmatpush.bf16.msra.mxu0 %v168
  %180 = vmatpush.bf16.msra.mxu0 %v167
  %181 = vmatpush.bf16.msra.mxu0 %v166
  %182 = vmatpush.bf16.msra.mxu0 %v165
  %183 = vmatpush.bf16.msra.mxu0 %v164
  %184 = vmatpush.bf16.msra.mxu0 %v163
  %185 = vmatpush.bf16.msra.mxu0 %v162
  %186 = vmatmul.bf16.gmra.mxu0 %v114
  %v187 = vpop.f32.mrf.mxu0
  %v188 = vadd.f32 0.0, %v187
  %v189 = vpop.f32.mrf.mxu0
  %v190 = vadd.f32 0.0, %v189
  %191 = vmatmul.bf16.gmra.mxu0 %v115
  %v192 = vpop.f32.mrf.mxu0
  %v193 = vadd.f32 0.0, %v192
  %v194 = vpop.f32.mrf.mxu0
  %v195 = vadd.f32 0.0, %v194
  %196 = vmatmul.bf16.gmra.mxu0 %v116
  %v197 = vpop.f32.mrf.mxu0
  %v198 = vadd.f32 0.0, %v197
  %v199 = vpop.f32.mrf.mxu0
  %v200 = vadd.f32 0.0, %v199
  %201 = vmatmul.bf16.gmra.mxu0 %v117
  %v202 = vpop.f32.mrf.mxu0
  %v203 = vadd.f32 0.0, %v202
  %v204 = vpop.f32.mrf.mxu0
  %v205 = vadd.f32 0.0, %v204
  %206 = vmatmul.bf16.gmra.mxu0 %v118
  %v207 = vpop.f32.mrf.mxu0
  %v208 = vadd.f32 0.0, %v207
  %v209 = vpop.f32.mrf.mxu0
  %v210 = vadd.f32 0.0, %v209
  %211 = vmatmul.bf16.gmra.mxu0 %v119
  %v212 = vpop.f32.mrf.mxu0
  %v213 = vadd.f32 0.0, %v212
  %v214 = vpop.f32.mrf.mxu0
  %v215 = vadd.f32 0.0, %v214
  %216 = vmatmul.bf16.gmra.mxu0 %v120
  %v217 = vpop.f32.mrf.mxu0
  %v218 = vadd.f32 0.0, %v217
  %v219 = vpop.f32.mrf.mxu0
  %v220 = vadd.f32 0.0, %v219
  %221 = vmatmul.bf16.gmra.mxu0 %v121
  %v222 = vpop.f32.mrf.mxu0
  %v223 = vadd.f32 0.0, %v222
  %v224 = vpop.f32.mrf.mxu0
  %v225 = vadd.f32 0.0, %v224
  %226 = vdwg.mxu0
  %v227 = vadd.f32 %v34, %v188
  %v228 = vadd.f32 %v35, %v190
  %v229 = vadd.f32 %v36, %v193
  %v230 = vadd.f32 %v37, %v195
  %v231 = vadd.f32 %v38, %v198
  %v232 = vadd.f32 %v39, %v200
  %v233 = vadd.f32 %v40, %v203
  %v234 = vadd.f32 %v41, %v205
  %v235 = vadd.f32 %v42, %v208
  %v236 = vadd.f32 %v43, %v210
  %v237 = vadd.f32 %v44, %v213
  %v238 = vadd.f32 %v45, %v215
  %v239 = vadd.f32 %v46, %v218
  %v240 = vadd.f32 %v47, %v220
  %v241 = vadd.f32 %v48, %v223
  %v242 = vadd.f32 %v49, %v225
  %243 = vst [vmem:[#allocation2] sm:$0xff] %v227
  %244 = vst [vmem:[#allocation2 + $0x8] sm:$0xff] %v228
  %245 = vst [vmem:[#allocation2 + $0x10] sm:$0xff] %v229
  %246 = vst [vmem:[#allocation2 + $0x18] sm:$0xff] %v230
  %247 = vst [vmem:[#allocation2 + $0x20] sm:$0xff] %v231
  %248 = vst [vmem:[#allocation2 + $0x28] sm:$0xff] %v232
  %249 = vst [vmem:[#allocation2 + $0x30] sm:$0xff] %v233
  %250 = vst [vmem:[#allocation2 + $0x38] sm:$0xff] %v234
  %251 = vst [vmem:[#allocation2 + $0x40] sm:$0xff] %v235
  %252 = vst [vmem:[#allocation2 + $0x48] sm:$0xff] %v236
  %253 = vst [vmem:[#allocation2 + $0x50] sm:$0xff] %v237
  %254 = vst [vmem:[#allocation2 + $0x58] sm:$0xff] %v238
  %255 = vst [vmem:[#allocation2 + $0x60] sm:$0xff] %v239
  %256 = vst [vmem:[#allocation2 + $0x68] sm:$0xff] %v240
  %257 = vst [vmem:[#allocation2 + $0x70] sm:$0xff] %v241
  %258 = vst [vmem:[#allocation2 + $0x78] sm:$0xff] %v242
  // Predicated region
  $region18: #{basic_block_forward.3} parent=0 // pred_check
    %p259 = pneg %p14
  $region19: #{basic_block_forward.3} parent=0 // pred_check_branch
    %261 = sbr.rel (%p259) target = $region21
  $region20: #{basic_block_forward.3} parent=0 // pred_region
    %v262 = vld [vmem:[#allocation2] sm:$0xff]
    %v263 = vld [vmem:[#allocation2 + $0x8] sm:$0xff]
    %v264 = vld [vmem:[#allocation2 + $0x10] sm:$0xff]
    %v265 = vld [vmem:[#allocation2 + $0x18] sm:$0xff]
    %v266 = vld [vmem:[#allocation2 + $0x20] sm:$0xff]
    %v267 = vld [vmem:[#allocation2 + $0x28] sm:$0xff]
    %v268 = vld [vmem:[#allocation2 + $0x30] sm:$0xff]
    %v269 = vld [vmem:[#allocation2 + $0x38] sm:$0xff]
    %v270 = vld [vmem:[#allocation2 + $0x40] sm:$0xff]
    %v271 = vld [vmem:[#allocation2 + $0x48] sm:$0xff]
    %v272 = vld [vmem:[#allocation2 + $0x50] sm:$0xff]
    %v273 = vld [vmem:[#allocation2 + $0x58] sm:$0xff]
    %v274 = vld [vmem:[#allocation2 + $0x60] sm:$0xff]
    %v275 = vld [vmem:[#allocation2 + $0x68] sm:$0xff]
    %v276 = vld [vmem:[#allocation2 + $0x70] sm:$0xff]
    %v277 = vld [vmem:[#allocation2 + $0x78] sm:$0xff]
    %v278 = vld [vmem:[%s2] sm:$0x1]
    %v280 = vperm.slane %v278, 0
    %v282 = vadd.f32 %v262, %v280
    %v283 = vadd.f32 %v263, %v280
    %v284 = vadd.f32 %v264, %v280
    %v285 = vadd.f32 %v265, %v280
    %v286 = vadd.f32 %v266, %v280
    %v287 = vadd.f32 %v267, %v280
    %v288 = vadd.f32 %v268, %v280
    %v289 = vadd.f32 %v269, %v280
    %v290 = vadd.f32 %v270, %v280
    %v291 = vadd.f32 %v271, %v280
    %v292 = vadd.f32 %v272, %v280
    %v293 = vadd.f32 %v273, %v280
    %v294 = vadd.f32 %v274, %v280
    %v295 = vadd.f32 %v275, %v280
    %v296 = vadd.f32 %v276, %v280
    %v297 = vadd.f32 %v277, %v280
    %v298 = vmax.f32 %v282, 0.0
    %v299 = vmax.f32 %v283, 0.0
    %v300 = vmax.f32 %v284, 0.0
    %v301 = vmax.f32 %v285, 0.0
    %v302 = vmax.f32 %v286, 0.0
    %v303 = vmax.f32 %v287, 0.0
    %v304 = vmax.f32 %v288, 0.0
    %v305 = vmax.f32 %v289, 0.0
    %v306 = vmax.f32 %v290, 0.0
    %v307 = vmax.f32 %v291, 0.0
    %v308 = vmax.f32 %v292, 0.0
    %v309 = vmax.f32 %v293, 0.0
    %v310 = vmax.f32 %v294, 0.0
    %v311 = vmax.f32 %v295, 0.0
    %v312 = vmax.f32 %v296, 0.0
    %v313 = vmax.f32 %v297, 0.0
    %v314 = vpack.c.bf16 %v298, %v298
    %v315 = vpack.c.bf16 %v299, %v299
    %v316 = vpack.c.bf16 %v300, %v300
    %v317 = vpack.c.bf16 %v301, %v301
    %v318 = vpack.c.bf16 %v302, %v302
    %v319 = vpack.c.bf16 %v303, %v303
    %v320 = vpack.c.bf16 %v304, %v304
    %v321 = vpack.c.bf16 %v305, %v305
    %v322 = vpack.c.bf16 %v306, %v306
    %v323 = vpack.c.bf16 %v307, %v307
    %v324 = vpack.c.bf16 %v308, %v308
    %v325 = vpack.c.bf16 %v309, %v309
    %v326 = vpack.c.bf16 %v310, %v310
    %v327 = vpack.c.bf16 %v311, %v311
    %v328 = vpack.c.bf16 %v312, %v312
    %v329 = vpack.c.bf16 %v313, %v313
    %330 = vst [vmem:[%s3] sm:$0xf] %v314
    %331 = vst [vmem:[%s3 + $0x4] sm:$0xf] %v315
    %332 = vst [vmem:[%s3 + $0x8] sm:$0xf] %v316
    %333 = vst [vmem:[%s3 + $0xc] sm:$0xf] %v317
    %334 = vst [vmem:[%s3 + $0x10] sm:$0xf] %v318
    %335 = vst [vmem:[%s3 + $0x14] sm:$0xf] %v319
    %336 = vst [vmem:[%s3 + $0x18] sm:$0xf] %v320
    %337 = vst [vmem:[%s3 + $0x1c] sm:$0xf] %v321
    %338 = vst [vmem:[%s3 + $0x20] sm:$0xf] %v322
    %339 = vst [vmem:[%s3 + $0x24] sm:$0xf] %v323
    %340 = vst [vmem:[%s3 + $0x28] sm:$0xf] %v324
    %341 = vst [vmem:[%s3 + $0x2c] sm:$0xf] %v325
    %342 = vst [vmem:[%s3 + $0x30] sm:$0xf] %v326
    %343 = vst [vmem:[%s3 + $0x34] sm:$0xf] %v327
    %344 = vst [vmem:[%s3 + $0x38] sm:$0xf] %v328
    %345 = vst [vmem:[%s3 + $0x3c] sm:$0xf] %v329
  $region21: #{basic_block_forward.3} parent=0 // pred_fallthru
    _
  // Predicated region
  $region22: #{basic_block_forward.3} parent=0 // pred_check
    _
  $region23: #{basic_block_forward.3} parent=0 // pred_check_branch
    %347 = sbr.rel (0) target = $region25
  $region24: #{basic_block_forward.3} parent=0 // pred_region
    _
  $region25: #{basic_block_forward.3} parent=0 // pred_fallthru
    _
  // Predicated region
  $region26: #{basic_block_forward.3} parent=0 // pred_check
    _
  $region27: #{basic_block_forward.3} parent=0 // pred_check_branch
    %349 = sbr.rel (0) target = $region29
  $region28: #{basic_block_forward.3} parent=0 // pred_region
    _
  $region29: #{basic_block_forward.3} parent=0 // pred_fallthru
    _

// kernel: basic_block_forward.4
$region0: #{basic_block_forward.4}
  #allocation0 [shape = 'u32[]', space=smem, size = 0x4, offset = 0x4, fixed_abs, tag = 'smem constant byte address 0x4 - core index']
  #allocation1 [shape = 'u32[72,128]{1,0:T(1,128)}', space=vmem, size = 0x9000, scoped, tag = 'internal scratch']
  #allocation2 [shape = 'f32[128,128]{1,0:T(8,128)}', space=vmem, size = 0x10000, scoped, tag = 'scratch operand']
  %s0 = inlined_call_operand.vmem [shape: bf16[128,128], index: 0, kind: input, shape index: {}]
  %s1 = inlined_call_operand.vmem [shape: bf16[128,128], index: 1, kind: input, shape index: {}]
  %s2 = inlined_call_operand.vmem [shape: f32[1,128], index: 2, kind: input, shape index: {}]
  %s3 = inlined_call_operand.vmem [shape: bf16[128,128], index: 3, kind: output, shape index: {}]
  %s4 = sld [smem:[#allocation0]]
  $region30: #{basic_block_forward.4} parent=0
    _
  %s6 = ssub.s32 1, %s4
  %s7 = scalar_select 0, %s6, %s4
  // Predicated region
  $region2: #{basic_block_forward.4} parent=0 // pred_check
    _
  $region3: #{basic_block_forward.4} parent=0 // pred_check_branch
    %9 = sbr.rel (0) target = $region5
  $region4: #{basic_block_forward.4} parent=0 // pred_region
    _
  $region5: #{basic_block_forward.4} parent=0 // pred_fallthru
    _
  // Predicated region
  $region6: #{basic_block_forward.4} parent=0 // pred_check
    _
  $region7: #{basic_block_forward.4} parent=0 // pred_check_branch
    %11 = sbr.rel (0) target = $region9
  $region8: #{basic_block_forward.4} parent=0 // pred_region
    _
  $region9: #{basic_block_forward.4} parent=0 // pred_fallthru
    _
  // Predicated region
  $region10: #{basic_block_forward.4} parent=0 // pred_check
    _
  $region11: #{basic_block_forward.4} parent=0 // pred_check_branch
    %13 = sbr.rel (0) target = $region13
  $region12: #{basic_block_forward.4} parent=0 // pred_region
    _
  $region13: #{basic_block_forward.4} parent=0 // pred_fallthru
    _
  %p14 = scmp.eq.s32.totalorder 0, 0
  // Predicated region
  $region14: #{basic_block_forward.4} parent=0 // pred_check
    %p15 = pneg %p14
  $region15: #{basic_block_forward.4} parent=0 // pred_check_branch
    %17 = sbr.rel (%p15) target = $region17
  $region16: #{basic_block_forward.4} parent=0 // pred_region
    %18 = vst [vmem:[#allocation2] sm:$0xff] 0.0
    %19 = vst [vmem:[#allocation2 + $0x8] sm:$0xff] 0.0
    %20 = vst [vmem:[#allocation2 + $0x10] sm:$0xff] 0.0
    %21 = vst [vmem:[#allocation2 + $0x18] sm:$0xff] 0.0
    %22 = vst [vmem:[#allocation2 + $0x20] sm:$0xff] 0.0
    %23 = vst [vmem:[#allocation2 + $0x28] sm:$0xff] 0.0
    %24 = vst [vmem:[#allocation2 + $0x30] sm:$0xff] 0.0
    %25 = vst [vmem:[#allocation2 + $0x38] sm:$0xff] 0.0
    %26 = vst [vmem:[#allocation2 + $0x40] sm:$0xff] 0.0
    %27 = vst [vmem:[#allocation2 + $0x48] sm:$0xff] 0.0
    %28 = vst [vmem:[#allocation2 + $0x50] sm:$0xff] 0.0
    %29 = vst [vmem:[#allocation2 + $0x58] sm:$0xff] 0.0
    %30 = vst [vmem:[#allocation2 + $0x60] sm:$0xff] 0.0
    %31 = vst [vmem:[#allocation2 + $0x68] sm:$0xff] 0.0
    %32 = vst [vmem:[#allocation2 + $0x70] sm:$0xff] 0.0
    %33 = vst [vmem:[#allocation2 + $0x78] sm:$0xff] 0.0
  $region17: #{basic_block_forward.4} parent=0 // pred_fallthru
    _
  %v34 = vld [vmem:[#allocation2] sm:$0xff]
  %v35 = vld [vmem:[#allocation2 + $0x8] sm:$0xff]
  %v36 = vld [vmem:[#allocation2 + $0x10] sm:$0xff]
  %v37 = vld [vmem:[#allocation2 + $0x18] sm:$0xff]
  %v38 = vld [vmem:[#allocation2 + $0x20] sm:$0xff]
  %v39 = vld [vmem:[#allocation2 + $0x28] sm:$0xff]
  %v40 = vld [vmem:[#allocation2 + $0x30] sm:$0xff]
  %v41 = vld [vmem:[#allocation2 + $0x38] sm:$0xff]
  %v42 = vld [vmem:[#allocation2 + $0x40] sm:$0xff]
  %v43 = vld [vmem:[#allocation2 + $0x48] sm:$0xff]
  %v44 = vld [vmem:[#allocation2 + $0x50] sm:$0xff]
  %v45 = vld [vmem:[#allocation2 + $0x58] sm:$0xff]
  %v46 = vld [vmem:[#allocation2 + $0x60] sm:$0xff]
  %v47 = vld [vmem:[#allocation2 + $0x68] sm:$0xff]
  %v48 = vld [vmem:[#allocation2 + $0x70] sm:$0xff]
  %v49 = vld [vmem:[#allocation2 + $0x78] sm:$0xff]
  %v50 = vld [vmem:[%s0] sm:$0xf]
  %v51 = vld [vmem:[%s0 + $0x4] sm:$0xf]
  %v52 = vld [vmem:[%s0 + $0x8] sm:$0xf]
  %v53 = vld [vmem:[%s0 + $0xc] sm:$0xf]
  %v54 = vld [vmem:[%s0 + $0x10] sm:$0xf]
  %v55 = vld [vmem:[%s0 + $0x14] sm:$0xf]
  %v56 = vld [vmem:[%s0 + $0x18] sm:$0xf]
  %v57 = vld [vmem:[%s0 + $0x1c] sm:$0xf]
  %v58 = vld [vmem:[%s0 + $0x20] sm:$0xf]
  %v59 = vld [vmem:[%s0 + $0x24] sm:$0xf]
  %v60 = vld [vmem:[%s0 + $0x28] sm:$0xf]
  %v61 = vld [vmem:[%s0 + $0x2c] sm:$0xf]
  %v62 = vld [vmem:[%s0 + $0x30] sm:$0xf]
  %v63 = vld [vmem:[%s0 + $0x34] sm:$0xf]
  %v64 = vld [vmem:[%s0 + $0x38] sm:$0xf]
  %v65 = vld [vmem:[%s0 + $0x3c] sm:$0xf]
  %v66 = vld [vmem:[%s1] sm:$0xf]
  %v67 = vld [vmem:[%s1 + $0x4] sm:$0xf]
  %v68 = vld [vmem:[%s1 + $0x8] sm:$0xf]
  %v69 = vld [vmem:[%s1 + $0xc] sm:$0xf]
  %v70 = vld [vmem:[%s1 + $0x10] sm:$0xf]
  %v71 = vld [vmem:[%s1 + $0x14] sm:$0xf]
  %v72 = vld [vmem:[%s1 + $0x18] sm:$0xf]
  %v73 = vld [vmem:[%s1 + $0x1c] sm:$0xf]
  %v74 = vld [vmem:[%s1 + $0x20] sm:$0xf]
  %v75 = vld [vmem:[%s1 + $0x24] sm:$0xf]
  %v76 = vld [vmem:[%s1 + $0x28] sm:$0xf]
  %v77 = vld [vmem:[%s1 + $0x2c] sm:$0xf]
  %v78 = vld [vmem:[%s1 + $0x30] sm:$0xf]
  %v79 = vld [vmem:[%s1 + $0x34] sm:$0xf]
  %v80 = vld [vmem:[%s1 + $0x38] sm:$0xf]
  %v81 = vld [vmem:[%s1 + $0x3c] sm:$0xf]
  %v98 = vunpack.c.l.b16 %v50
  %v99 = vunpack.c.l.b16 %v51
  %v100 = vunpack.c.l.b16 %v52
  %v101 = vunpack.c.l.b16 %v53
  %v102 = vunpack.c.l.b16 %v54
  %v103 = vunpack.c.l.b16 %v55
  %v104 = vunpack.c.l.b16 %v56
  %v105 = vunpack.c.l.b16 %v57
  %v106 = vunpack.c.l.b16 %v58
  %v107 = vunpack.c.l.b16 %v59
  %v108 = vunpack.c.l.b16 %v60
  %v109 = vunpack.c.l.b16 %v61
  %v110 = vunpack.c.l.b16 %v62
  %v111 = vunpack.c.l.b16 %v63
  %v112 = vunpack.c.l.b16 %v64
  %v113 = vunpack.c.l.b16 %v65
  %v114 = vpack.c.b16 %v99, %v98
  %v115 = vpack.c.b16 %v101, %v100
  %v116 = vpack.c.b16 %v103, %v102
  %v117 = vpack.c.b16 %v105, %v104
  %v118 = vpack.c.b16 %v107, %v106
  %v119 = vpack.c.b16 %v109, %v108
  %v120 = vpack.c.b16 %v111, %v110
  %v121 = vpack.c.b16 %v113, %v112
  %v146 = vunpack.c.l.b16 %v66
  %v147 = vunpack.c.l.b16 %v67
  %v148 = vunpack.c.l.b16 %v68
  %v149 = vunpack.c.l.b16 %v69
  %v150 = vunpack.c.l.b16 %v70
  %v151 = vunpack.c.l.b16 %v71
  %v152 = vunpack.c.l.b16 %v72
  %v153 = vunpack.c.l.b16 %v73
  %v154 = vunpack.c.l.b16 %v74
  %v155 = vunpack.c.l.b16 %v75
  %v156 = vunpack.c.l.b16 %v76
  %v157 = vunpack.c.l.b16 %v77
  %v158 = vunpack.c.l.b16 %v78
  %v159 = vunpack.c.l.b16 %v79
  %v160 = vunpack.c.l.b16 %v80
  %v161 = vunpack.c.l.b16 %v81
  %v162 = vpack.c.b16 %v147, %v146
  %v163 = vpack.c.b16 %v149, %v148
  %v164 = vpack.c.b16 %v151, %v150
  %v165 = vpack.c.b16 %v153, %v152
  %v166 = vpack.c.b16 %v155, %v154
  %v167 = vpack.c.b16 %v157, %v156
  %v168 = vpack.c.b16 %v159, %v158
  %v169 = vpack.c.b16 %v161, %v160
  %178 = vmatpush.bf16.msra.mxu0 %v169
  %179 = vmatpush.bf16.msra.mxu0 %v168
  %180 = vmatpush.bf16.msra.mxu0 %v167
  %181 = vmatpush.bf16.msra.mxu0 %v166
  %182 = vmatpush.bf16.msra.mxu0 %v165
  %183 = vmatpush.bf16.msra.mxu0 %v164
  %184 = vmatpush.bf16.msra.mxu0 %v163
  %185 = vmatpush.bf16.msra.mxu0 %v162
  %186 = vmatmul.bf16.gmra.mxu0 %v114
  %v187 = vpop.f32.mrf.mxu0
  %v188 = vadd.f32 0.0, %v187
  %v189 = vpop.f32.mrf.mxu0
  %v190 = vadd.f32 0.0, %v189
  %191 = vmatmul.bf16.gmra.mxu0 %v115
  %v192 = vpop.f32.mrf.mxu0
  %v193 = vadd.f32 0.0, %v192
  %v194 = vpop.f32.mrf.mxu0
  %v195 = vadd.f32 0.0, %v194
  %196 = vmatmul.bf16.gmra.mxu0 %v116
  %v197 = vpop.f32.mrf.mxu0
  %v198 = vadd.f32 0.0, %v197
  %v199 = vpop.f32.mrf.mxu0
  %v200 = vadd.f32 0.0, %v199
  %201 = vmatmul.bf16.gmra.mxu0 %v117
  %v202 = vpop.f32.mrf.mxu0
  %v203 = vadd.f32 0.0, %v202
  %v204 = vpop.f32.mrf.mxu0
  %v205 = vadd.f32 0.0, %v204
  %206 = vmatmul.bf16.gmra.mxu0 %v118
  %v207 = vpop.f32.mrf.mxu0
  %v208 = vadd.f32 0.0, %v207
  %v209 = vpop.f32.mrf.mxu0
  %v210 = vadd.f32 0.0, %v209
  %211 = vmatmul.bf16.gmra.mxu0 %v119
  %v212 = vpop.f32.mrf.mxu0
  %v213 = vadd.f32 0.0, %v212
  %v214 = vpop.f32.mrf.mxu0
  %v215 = vadd.f32 0.0, %v214
  %216 = vmatmul.bf16.gmra.mxu0 %v120
  %v217 = vpop.f32.mrf.mxu0
  %v218 = vadd.f32 0.0, %v217
  %v219 = vpop.f32.mrf.mxu0
  %v220 = vadd.f32 0.0, %v219
  %221 = vmatmul.bf16.gmra.mxu0 %v121
  %v222 = vpop.f32.mrf.mxu0
  %v223 = vadd.f32 0.0, %v222
  %v224 = vpop.f32.mrf.mxu0
  %v225 = vadd.f32 0.0, %v224
  %226 = vdwg.mxu0
  %v227 = vadd.f32 %v34, %v188
  %v228 = vadd.f32 %v35, %v190
  %v229 = vadd.f32 %v36, %v193
  %v230 = vadd.f32 %v37, %v195
  %v231 = vadd.f32 %v38, %v198
  %v232 = vadd.f32 %v39, %v200
  %v233 = vadd.f32 %v40, %v203
  %v234 = vadd.f32 %v41, %v205
  %v235 = vadd.f32 %v42, %v208
  %v236 = vadd.f32 %v43, %v210
  %v237 = vadd.f32 %v44, %v213
  %v238 = vadd.f32 %v45, %v215
  %v239 = vadd.f32 %v46, %v218
  %v240 = vadd.f32 %v47, %v220
  %v241 = vadd.f32 %v48, %v223
  %v242 = vadd.f32 %v49, %v225
  %243 = vst [vmem:[#allocation2] sm:$0xff] %v227
  %244 = vst [vmem:[#allocation2 + $0x8] sm:$0xff] %v228
  %245 = vst [vmem:[#allocation2 + $0x10] sm:$0xff] %v229
  %246 = vst [vmem:[#allocation2 + $0x18] sm:$0xff] %v230
  %247 = vst [vmem:[#allocation2 + $0x20] sm:$0xff] %v231
  %248 = vst [vmem:[#allocation2 + $0x28] sm:$0xff] %v232
  %249 = vst [vmem:[#allocation2 + $0x30] sm:$0xff] %v233
  %250 = vst [vmem:[#allocation2 + $0x38] sm:$0xff] %v234
  %251 = vst [vmem:[#allocation2 + $0x40] sm:$0xff] %v235
  %252 = vst [vmem:[#allocation2 + $0x48] sm:$0xff] %v236
  %253 = vst [vmem:[#allocation2 + $0x50] sm:$0xff] %v237
  %254 = vst [vmem:[#allocation2 + $0x58] sm:$0xff] %v238
  %255 = vst [vmem:[#allocation2 + $0x60] sm:$0xff] %v239
  %256 = vst [vmem:[#allocation2 + $0x68] sm:$0xff] %v240
  %257 = vst [vmem:[#allocation2 + $0x70] sm:$0xff] %v241
  %258 = vst [vmem:[#allocation2 + $0x78] sm:$0xff] %v242
  // Predicated region
  $region18: #{basic_block_forward.4} parent=0 // pred_check
    %p259 = pneg %p14
  $region19: #{basic_block_forward.4} parent=0 // pred_check_branch
    %261 = sbr.rel (%p259) target = $region21
  $region20: #{basic_block_forward.4} parent=0 // pred_region
    %v262 = vld [vmem:[#allocation2] sm:$0xff]
    %v263 = vld [vmem:[#allocation2 + $0x8] sm:$0xff]
    %v264 = vld [vmem:[#allocation2 + $0x10] sm:$0xff]
    %v265 = vld [vmem:[#allocation2 + $0x18] sm:$0xff]
    %v266 = vld [vmem:[#allocation2 + $0x20] sm:$0xff]
    %v267 = vld [vmem:[#allocation2 + $0x28] sm:$0xff]
    %v268 = vld [vmem:[#allocation2 + $0x30] sm:$0xff]
    %v269 = vld [vmem:[#allocation2 + $0x38] sm:$0xff]
    %v270 = vld [vmem:[#allocation2 + $0x40] sm:$0xff]
    %v271 = vld [vmem:[#allocation2 + $0x48] sm:$0xff]
    %v272 = vld [vmem:[#allocation2 + $0x50] sm:$0xff]
    %v273 = vld [vmem:[#allocation2 + $0x58] sm:$0xff]
    %v274 = vld [vmem:[#allocation2 + $0x60] sm:$0xff]
    %v275 = vld [vmem:[#allocation2 + $0x68] sm:$0xff]
    %v276 = vld [vmem:[#allocation2 + $0x70] sm:$0xff]
    %v277 = vld [vmem:[#allocation2 + $0x78] sm:$0xff]
    %v278 = vld [vmem:[%s2] sm:$0x1]
    %v280 = vperm.slane %v278, 0
    %v282 = vadd.f32 %v262, %v280
    %v283 = vadd.f32 %v263, %v280
    %v284 = vadd.f32 %v264, %v280
    %v285 = vadd.f32 %v265, %v280
    %v286 = vadd.f32 %v266, %v280
    %v287 = vadd.f32 %v267, %v280
    %v288 = vadd.f32 %v268, %v280
    %v289 = vadd.f32 %v269, %v280
    %v290 = vadd.f32 %v270, %v280
    %v291 = vadd.f32 %v271, %v280
    %v292 = vadd.f32 %v272, %v280
    %v293 = vadd.f32 %v273, %v280
    %v294 = vadd.f32 %v274, %v280
    %v295 = vadd.f32 %v275, %v280
    %v296 = vadd.f32 %v276, %v280
    %v297 = vadd.f32 %v277, %v280
    %v298 = vpack.c.bf16 %v282, %v282
    %v299 = vpack.c.bf16 %v283, %v283
    %v300 = vpack.c.bf16 %v284, %v284
    %v301 = vpack.c.bf16 %v285, %v285
    %v302 = vpack.c.bf16 %v286, %v286
    %v303 = vpack.c.bf16 %v287, %v287
    %v304 = vpack.c.bf16 %v288, %v288
    %v305 = vpack.c.bf16 %v289, %v289
    %v306 = vpack.c.bf16 %v290, %v290
    %v307 = vpack.c.bf16 %v291, %v291
    %v308 = vpack.c.bf16 %v292, %v292
    %v309 = vpack.c.bf16 %v293, %v293
    %v310 = vpack.c.bf16 %v294, %v294
    %v311 = vpack.c.bf16 %v295, %v295
    %v312 = vpack.c.bf16 %v296, %v296
    %v313 = vpack.c.bf16 %v297, %v297
    %314 = vst [vmem:[%s3] sm:$0xf] %v298
    %315 = vst [vmem:[%s3 + $0x4] sm:$0xf] %v299
    %316 = vst [vmem:[%s3 + $0x8] sm:$0xf] %v300
    %317 = vst [vmem:[%s3 + $0xc] sm:$0xf] %v301
    %318 = vst [vmem:[%s3 + $0x10] sm:$0xf] %v302
    %319 = vst [vmem:[%s3 + $0x14] sm:$0xf] %v303
    %320 = vst [vmem:[%s3 + $0x18] sm:$0xf] %v304
    %321 = vst [vmem:[%s3 + $0x1c] sm:$0xf] %v305
    %322 = vst [vmem:[%s3 + $0x20] sm:$0xf] %v306
    %323 = vst [vmem:[%s3 + $0x24] sm:$0xf] %v307
    %324 = vst [vmem:[%s3 + $0x28] sm:$0xf] %v308
    %325 = vst [vmem:[%s3 + $0x2c] sm:$0xf] %v309
    %326 = vst [vmem:[%s3 + $0x30] sm:$0xf] %v310
    %327 = vst [vmem:[%s3 + $0x34] sm:$0xf] %v311
    %328 = vst [vmem:[%s3 + $0x38] sm:$0xf] %v312
    %329 = vst [vmem:[%s3 + $0x3c] sm:$0xf] %v313
  $region21: #{basic_block_forward.4} parent=0 // pred_fallthru
    _
  // Predicated region
  $region22: #{basic_block_forward.4} parent=0 // pred_check
    _
  $region23: #{basic_block_forward.4} parent=0 // pred_check_branch
    %331 = sbr.rel (0) target = $region25
  $region24: #{basic_block_forward.4} parent=0 // pred_region
    _
  $region25: #{basic_block_forward.4} parent=0 // pred_fallthru
    _
  // Predicated region
  $region26: #{basic_block_forward.4} parent=0 // pred_check
    _
  $region27: #{basic_block_forward.4} parent=0 // pred_check_branch
    %333 = sbr.rel (0) target = $region29
  $region28: #{basic_block_forward.4} parent=0 // pred_region
    _
  $region29: #{basic_block_forward.4} parent=0 // pred_fallthru
    _

// kernel: basic_block_forward.5
$region0: #{basic_block_forward.5}
  #allocation0 [shape = 'u32[]', space=smem, size = 0x4, offset = 0x4, fixed_abs, tag = 'smem constant byte address 0x4 - core index']
  #allocation1 [shape = 'u32[72,128]{1,0:T(1,128)}', space=vmem, size = 0x9000, scoped, tag = 'internal scratch']
  #allocation2 [shape = 'f32[128,128]{1,0:T(8,128)}', space=vmem, size = 0x10000, scoped, tag = 'scratch operand']
  %s0 = inlined_call_operand.vmem [shape: bf16[128,128], index: 0, kind: input, shape index: {}]
  %s1 = inlined_call_operand.vmem [shape: bf16[128,128], index: 1, kind: input, shape index: {}]
  %s2 = inlined_call_operand.vmem [shape: f32[1,128], index: 2, kind: input, shape index: {}]
  %s3 = inlined_call_operand.vmem [shape: bf16[128,128], index: 3, kind: input, shape index: {}]
  %s4 = inlined_call_operand.vmem [shape: bf16[128,128], index: 4, kind: output, shape index: {}]
  %s5 = sld [smem:[#allocation0]]
  $region34: #{basic_block_forward.5} parent=0
    _
  %s7 = ssub.s32 1, %s5
  %s8 = scalar_select 0, %s7, %s5
  // Predicated region
  $region2: #{basic_block_forward.5} parent=0 // pred_check
    _
  $region3: #{basic_block_forward.5} parent=0 // pred_check_branch
    %10 = sbr.rel (0) target = $region5
  $region4: #{basic_block_forward.5} parent=0 // pred_region
    _
  $region5: #{basic_block_forward.5} parent=0 // pred_fallthru
    _
  // Predicated region
  $region6: #{basic_block_forward.5} parent=0 // pred_check
    _
  $region7: #{basic_block_forward.5} parent=0 // pred_check_branch
    %12 = sbr.rel (0) target = $region9
  $region8: #{basic_block_forward.5} parent=0 // pred_region
    _
  $region9: #{basic_block_forward.5} parent=0 // pred_fallthru
    _
  // Predicated region
  $region10: #{basic_block_forward.5} parent=0 // pred_check
    _
  $region11: #{basic_block_forward.5} parent=0 // pred_check_branch
    %14 = sbr.rel (0) target = $region13
  $region12: #{basic_block_forward.5} parent=0 // pred_region
    _
  $region13: #{basic_block_forward.5} parent=0 // pred_fallthru
    _
  // Predicated region
  $region14: #{basic_block_forward.5} parent=0 // pred_check
    _
  $region15: #{basic_block_forward.5} parent=0 // pred_check_branch
    %16 = sbr.rel (0) target = $region17
  $region16: #{basic_block_forward.5} parent=0 // pred_region
    _
  $region17: #{basic_block_forward.5} parent=0 // pred_fallthru
    _
  %p17 = scmp.eq.s32.totalorder 0, 0
  // Predicated region
  $region18: #{basic_block_forward.5} parent=0 // pred_check
    %p18 = pneg %p17
  $region19: #{basic_block_forward.5} parent=0 // pred_check_branch
    %20 = sbr.rel (%p18) target = $region21
  $region20: #{basic_block_forward.5} parent=0 // pred_region
    %21 = vst [vmem:[#allocation2] sm:$0xff] 0.0
    %22 = vst [vmem:[#allocation2 + $0x8] sm:$0xff] 0.0
    %23 = vst [vmem:[#allocation2 + $0x10] sm:$0xff] 0.0
    %24 = vst [vmem:[#allocation2 + $0x18] sm:$0xff] 0.0
    %25 = vst [vmem:[#allocation2 + $0x20] sm:$0xff] 0.0
    %26 = vst [vmem:[#allocation2 + $0x28] sm:$0xff] 0.0
    %27 = vst [vmem:[#allocation2 + $0x30] sm:$0xff] 0.0
    %28 = vst [vmem:[#allocation2 + $0x38] sm:$0xff] 0.0
    %29 = vst [vmem:[#allocation2 + $0x40] sm:$0xff] 0.0
    %30 = vst [vmem:[#allocation2 + $0x48] sm:$0xff] 0.0
    %31 = vst [vmem:[#allocation2 + $0x50] sm:$0xff] 0.0
    %32 = vst [vmem:[#allocation2 + $0x58] sm:$0xff] 0.0
    %33 = vst [vmem:[#allocation2 + $0x60] sm:$0xff] 0.0
    %34 = vst [vmem:[#allocation2 + $0x68] sm:$0xff] 0.0
    %35 = vst [vmem:[#allocation2 + $0x70] sm:$0xff] 0.0
    %36 = vst [vmem:[#allocation2 + $0x78] sm:$0xff] 0.0
  $region21: #{basic_block_forward.5} parent=0 // pred_fallthru
    _
  %v37 = vld [vmem:[#allocation2] sm:$0xff]
  %v38 = vld [vmem:[#allocation2 + $0x8] sm:$0xff]
  %v39 = vld [vmem:[#allocation2 + $0x10] sm:$0xff]
  %v40 = vld [vmem:[#allocation2 + $0x18] sm:$0xff]
  %v41 = vld [vmem:[#allocation2 + $0x20] sm:$0xff]
  %v42 = vld [vmem:[#allocation2 + $0x28] sm:$0xff]
  %v43 = vld [vmem:[#allocation2 + $0x30] sm:$0xff]
  %v44 = vld [vmem:[#allocation2 + $0x38] sm:$0xff]
  %v45 = vld [vmem:[#allocation2 + $0x40] sm:$0xff]
  %v46 = vld [vmem:[#allocation2 + $0x48] sm:$0xff]
  %v47 = vld [vmem:[#allocation2 + $0x50] sm:$0xff]
  %v48 = vld [vmem:[#allocation2 + $0x58] sm:$0xff]
  %v49 = vld [vmem:[#allocation2 + $0x60] sm:$0xff]
  %v50 = vld [vmem:[#allocation2 + $0x68] sm:$0xff]
  %v51 = vld [vmem:[#allocation2 + $0x70] sm:$0xff]
  %v52 = vld [vmem:[#allocation2 + $0x78] sm:$0xff]
  %v53 = vld [vmem:[%s0] sm:$0xf]
  %v54 = vld [vmem:[%s0 + $0x4] sm:$0xf]
  %v55 = vld [vmem:[%s0 + $0x8] sm:$0xf]
  %v56 = vld [vmem:[%s0 + $0xc] sm:$0xf]
  %v57 = vld [vmem:[%s0 + $0x10] sm:$0xf]
  %v58 = vld [vmem:[%s0 + $0x14] sm:$0xf]
  %v59 = vld [vmem:[%s0 + $0x18] sm:$0xf]
  %v60 = vld [vmem:[%s0 + $0x1c] sm:$0xf]
  %v61 = vld [vmem:[%s0 + $0x20] sm:$0xf]
  %v62 = vld [vmem:[%s0 + $0x24] sm:$0xf]
  %v63 = vld [vmem:[%s0 + $0x28] sm:$0xf]
  %v64 = vld [vmem:[%s0 + $0x2c] sm:$0xf]
  %v65 = vld [vmem:[%s0 + $0x30] sm:$0xf]
  %v66 = vld [vmem:[%s0 + $0x34] sm:$0xf]
  %v67 = vld [vmem:[%s0 + $0x38] sm:$0xf]
  %v68 = vld [vmem:[%s0 + $0x3c] sm:$0xf]
  %v69 = vld [vmem:[%s1] sm:$0xf]
  %v70 = vld [vmem:[%s1 + $0x4] sm:$0xf]
  %v71 = vld [vmem:[%s1 + $0x8] sm:$0xf]
  %v72 = vld [vmem:[%s1 + $0xc] sm:$0xf]
  %v73 = vld [vmem:[%s1 + $0x10] sm:$0xf]
  %v74 = vld [vmem:[%s1 + $0x14] sm:$0xf]
  %v75 = vld [vmem:[%s1 + $0x18] sm:$0xf]
  %v76 = vld [vmem:[%s1 + $0x1c] sm:$0xf]
  %v77 = vld [vmem:[%s1 + $0x20] sm:$0xf]
  %v78 = vld [vmem:[%s1 + $0x24] sm:$0xf]
  %v79 = vld [vmem:[%s1 + $0x28] sm:$0xf]
  %v80 = vld [vmem:[%s1 + $0x2c] sm:$0xf]
  %v81 = vld [vmem:[%s1 + $0x30] sm:$0xf]
  %v82 = vld [vmem:[%s1 + $0x34] sm:$0xf]
  %v83 = vld [vmem:[%s1 + $0x38] sm:$0xf]
  %v84 = vld [vmem:[%s1 + $0x3c] sm:$0xf]
  %v101 = vunpack.c.l.b16 %v53
  %v102 = vunpack.c.l.b16 %v54
  %v103 = vunpack.c.l.b16 %v55
  %v104 = vunpack.c.l.b16 %v56
  %v105 = vunpack.c.l.b16 %v57
  %v106 = vunpack.c.l.b16 %v58
  %v107 = vunpack.c.l.b16 %v59
  %v108 = vunpack.c.l.b16 %v60
  %v109 = vunpack.c.l.b16 %v61
  %v110 = vunpack.c.l.b16 %v62
  %v111 = vunpack.c.l.b16 %v63
  %v112 = vunpack.c.l.b16 %v64
  %v113 = vunpack.c.l.b16 %v65
  %v114 = vunpack.c.l.b16 %v66
  %v115 = vunpack.c.l.b16 %v67
  %v116 = vunpack.c.l.b16 %v68
  %v117 = vpack.c.b16 %v102, %v101
  %v118 = vpack.c.b16 %v104, %v103
  %v119 = vpack.c.b16 %v106, %v105
  %v120 = vpack.c.b16 %v108, %v107
  %v121 = vpack.c.b16 %v110, %v109
  %v122 = vpack.c.b16 %v112, %v111
  %v123 = vpack.c.b16 %v114, %v113
  %v124 = vpack.c.b16 %v116, %v115
  %v149 = vunpack.c.l.b16 %v69
  %v150 = vunpack.c.l.b16 %v70
  %v151 = vunpack.c.l.b16 %v71
  %v152 = vunpack.c.l.b16 %v72
  %v153 = vunpack.c.l.b16 %v73
  %v154 = vunpack.c.l.b16 %v74
  %v155 = vunpack.c.l.b16 %v75
  %v156 = vunpack.c.l.b16 %v76
  %v157 = vunpack.c.l.b16 %v77
  %v158 = vunpack.c.l.b16 %v78
  %v159 = vunpack.c.l.b16 %v79
  %v160 = vunpack.c.l.b16 %v80
  %v161 = vunpack.c.l.b16 %v81
  %v162 = vunpack.c.l.b16 %v82
  %v163 = vunpack.c.l.b16 %v83
  %v164 = vunpack.c.l.b16 %v84
  %v165 = vpack.c.b16 %v150, %v149
  %v166 = vpack.c.b16 %v152, %v151
  %v167 = vpack.c.b16 %v154, %v153
  %v168 = vpack.c.b16 %v156, %v155
  %v169 = vpack.c.b16 %v158, %v157
  %v170 = vpack.c.b16 %v160, %v159
  %v171 = vpack.c.b16 %v162, %v161
  %v172 = vpack.c.b16 %v164, %v163
  %181 = vmatpush.bf16.msra.mxu0 %v172
  %182 = vmatpush.bf16.msra.mxu0 %v171
  %183 = vmatpush.bf16.msra.mxu0 %v170
  %184 = vmatpush.bf16.msra.mxu0 %v169
  %185 = vmatpush.bf16.msra.mxu0 %v168
  %186 = vmatpush.bf16.msra.mxu0 %v167
  %187 = vmatpush.bf16.msra.mxu0 %v166
  %188 = vmatpush.bf16.msra.mxu0 %v165
  %189 = vmatmul.bf16.gmra.mxu0 %v117
  %v190 = vpop.f32.mrf.mxu0
  %v191 = vadd.f32 0.0, %v190
  %v192 = vpop.f32.mrf.mxu0
  %v193 = vadd.f32 0.0, %v192
  %194 = vmatmul.bf16.gmra.mxu0 %v118
  %v195 = vpop.f32.mrf.mxu0
  %v196 = vadd.f32 0.0, %v195
  %v197 = vpop.f32.mrf.mxu0
  %v198 = vadd.f32 0.0, %v197
  %199 = vmatmul.bf16.gmra.mxu0 %v119
  %v200 = vpop.f32.mrf.mxu0
  %v201 = vadd.f32 0.0, %v200
  %v202 = vpop.f32.mrf.mxu0
  %v203 = vadd.f32 0.0, %v202
  %204 = vmatmul.bf16.gmra.mxu0 %v120
  %v205 = vpop.f32.mrf.mxu0
  %v206 = vadd.f32 0.0, %v205
  %v207 = vpop.f32.mrf.mxu0
  %v208 = vadd.f32 0.0, %v207
  %209 = vmatmul.bf16.gmra.mxu0 %v121
  %v210 = vpop.f32.mrf.mxu0
  %v211 = vadd.f32 0.0, %v210
  %v212 = vpop.f32.mrf.mxu0
  %v213 = vadd.f32 0.0, %v212
  %214 = vmatmul.bf16.gmra.mxu0 %v122
  %v215 = vpop.f32.mrf.mxu0
  %v216 = vadd.f32 0.0, %v215
  %v217 = vpop.f32.mrf.mxu0
  %v218 = vadd.f32 0.0, %v217
  %219 = vmatmul.bf16.gmra.mxu0 %v123
  %v220 = vpop.f32.mrf.mxu0
  %v221 = vadd.f32 0.0, %v220
  %v222 = vpop.f32.mrf.mxu0
  %v223 = vadd.f32 0.0, %v222
  %224 = vmatmul.bf16.gmra.mxu0 %v124
  %v225 = vpop.f32.mrf.mxu0
  %v226 = vadd.f32 0.0, %v225
  %v227 = vpop.f32.mrf.mxu0
  %v228 = vadd.f32 0.0, %v227
  %229 = vdwg.mxu0
  %v230 = vadd.f32 %v37, %v191
  %v231 = vadd.f32 %v38, %v193
  %v232 = vadd.f32 %v39, %v196
  %v233 = vadd.f32 %v40, %v198
  %v234 = vadd.f32 %v41, %v201
  %v235 = vadd.f32 %v42, %v203
  %v236 = vadd.f32 %v43, %v206
  %v237 = vadd.f32 %v44, %v208
  %v238 = vadd.f32 %v45, %v211
  %v239 = vadd.f32 %v46, %v213
  %v240 = vadd.f32 %v47, %v216
  %v241 = vadd.f32 %v48, %v218
  %v242 = vadd.f32 %v49, %v221
  %v243 = vadd.f32 %v50, %v223
  %v244 = vadd.f32 %v51, %v226
  %v245 = vadd.f32 %v52, %v228
  %246 = vst [vmem:[#allocation2] sm:$0xff] %v230
  %247 = vst [vmem:[#allocation2 + $0x8] sm:$0xff] %v231
  %248 = vst [vmem:[#allocation2 + $0x10] sm:$0xff] %v232
  %249 = vst [vmem:[#allocation2 + $0x18] sm:$0xff] %v233
  %250 = vst [vmem:[#allocation2 + $0x20] sm:$0xff] %v234
  %251 = vst [vmem:[#allocation2 + $0x28] sm:$0xff] %v235
  %252 = vst [vmem:[#allocation2 + $0x30] sm:$0xff] %v236
  %253 = vst [vmem:[#allocation2 + $0x38] sm:$0xff] %v237
  %254 = vst [vmem:[#allocation2 + $0x40] sm:$0xff] %v238
  %255 = vst [vmem:[#allocation2 + $0x48] sm:$0xff] %v239
  %256 = vst [vmem:[#allocation2 + $0x50] sm:$0xff] %v240
  %257 = vst [vmem:[#allocation2 + $0x58] sm:$0xff] %v241
  %258 = vst [vmem:[#allocation2 + $0x60] sm:$0xff] %v242
  %259 = vst [vmem:[#allocation2 + $0x68] sm:$0xff] %v243
  %260 = vst [vmem:[#allocation2 + $0x70] sm:$0xff] %v244
  %261 = vst [vmem:[#allocation2 + $0x78] sm:$0xff] %v245
  // Predicated region
  $region22: #{basic_block_forward.5} parent=0 // pred_check
    %p262 = pneg %p17
  $region23: #{basic_block_forward.5} parent=0 // pred_check_branch
    %264 = sbr.rel (%p262) target = $region25
  $region24: #{basic_block_forward.5} parent=0 // pred_region
    %v265 = vld [vmem:[#allocation2] sm:$0xff]
    %v266 = vld [vmem:[#allocation2 + $0x8] sm:$0xff]
    %v267 = vld [vmem:[#allocation2 + $0x10] sm:$0xff]
    %v268 = vld [vmem:[#allocation2 + $0x18] sm:$0xff]
    %v269 = vld [vmem:[#allocation2 + $0x20] sm:$0xff]
    %v270 = vld [vmem:[#allocation2 + $0x28] sm:$0xff]
    %v271 = vld [vmem:[#allocation2 + $0x30] sm:$0xff]
    %v272 = vld [vmem:[#allocation2 + $0x38] sm:$0xff]
    %v273 = vld [vmem:[#allocation2 + $0x40] sm:$0xff]
    %v274 = vld [vmem:[#allocation2 + $0x48] sm:$0xff]
    %v275 = vld [vmem:[#allocation2 + $0x50] sm:$0xff]
    %v276 = vld [vmem:[#allocation2 + $0x58] sm:$0xff]
    %v277 = vld [vmem:[#allocation2 + $0x60] sm:$0xff]
    %v278 = vld [vmem:[#allocation2 + $0x68] sm:$0xff]
    %v279 = vld [vmem:[#allocation2 + $0x70] sm:$0xff]
    %v280 = vld [vmem:[#allocation2 + $0x78] sm:$0xff]
    %v281 = vld [vmem:[%s2] sm:$0x1]
    %v283 = vperm.slane %v281, 0
    %v285 = vadd.f32 %v265, %v283
    %v286 = vadd.f32 %v266, %v283
    %v287 = vadd.f32 %v267, %v283
    %v288 = vadd.f32 %v268, %v283
    %v289 = vadd.f32 %v269, %v283
    %v290 = vadd.f32 %v270, %v283
    %v291 = vadd.f32 %v271, %v283
    %v292 = vadd.f32 %v272, %v283
    %v293 = vadd.f32 %v273, %v283
    %v294 = vadd.f32 %v274, %v283
    %v295 = vadd.f32 %v275, %v283
    %v296 = vadd.f32 %v276, %v283
    %v297 = vadd.f32 %v277, %v283
    %v298 = vadd.f32 %v278, %v283
    %v299 = vadd.f32 %v279, %v283
    %v300 = vadd.f32 %v280, %v283
    %v301 = vld [vmem:[%s3] sm:$0xf]
    %v302 = vld [vmem:[%s3 + $0x4] sm:$0xf]
    %v303 = vld [vmem:[%s3 + $0x8] sm:$0xf]
    %v304 = vld [vmem:[%s3 + $0xc] sm:$0xf]
    %v305 = vld [vmem:[%s3 + $0x10] sm:$0xf]
    %v306 = vld [vmem:[%s3 + $0x14] sm:$0xf]
    %v307 = vld [vmem:[%s3 + $0x18] sm:$0xf]
    %v308 = vld [vmem:[%s3 + $0x1c] sm:$0xf]
    %v309 = vld [vmem:[%s3 + $0x20] sm:$0xf]
    %v310 = vld [vmem:[%s3 + $0x24] sm:$0xf]
    %v311 = vld [vmem:[%s3 + $0x28] sm:$0xf]
    %v312 = vld [vmem:[%s3 + $0x2c] sm:$0xf]
    %v313 = vld [vmem:[%s3 + $0x30] sm:$0xf]
    %v314 = vld [vmem:[%s3 + $0x34] sm:$0xf]
    %v315 = vld [vmem:[%s3 + $0x38] sm:$0xf]
    %v316 = vld [vmem:[%s3 + $0x3c] sm:$0xf]
    %v317 = vunpack.c.l.bf16 %v301
    %v318 = vunpack.c.l.bf16 %v302
    %v319 = vunpack.c.l.bf16 %v303
    %v320 = vunpack.c.l.bf16 %v304
    %v321 = vunpack.c.l.bf16 %v305
    %v322 = vunpack.c.l.bf16 %v306
    %v323 = vunpack.c.l.bf16 %v307
    %v324 = vunpack.c.l.bf16 %v308
    %v325 = vunpack.c.l.bf16 %v309
    %v326 = vunpack.c.l.bf16 %v310
    %v327 = vunpack.c.l.bf16 %v311
    %v328 = vunpack.c.l.bf16 %v312
    %v329 = vunpack.c.l.bf16 %v313
    %v330 = vunpack.c.l.bf16 %v314
    %v331 = vunpack.c.l.bf16 %v315
    %v332 = vunpack.c.l.bf16 %v316
    %v333 = vadd.f32 %v285, %v317
    %v334 = vadd.f32 %v286, %v318
    %v335 = vadd.f32 %v287, %v319
    %v336 = vadd.f32 %v288, %v320
    %v337 = vadd.f32 %v289, %v321
    %v338 = vadd.f32 %v290, %v322
    %v339 = vadd.f32 %v291, %v323
    %v340 = vadd.f32 %v292, %v324
    %v341 = vadd.f32 %v293, %v325
    %v342 = vadd.f32 %v294, %v326
    %v343 = vadd.f32 %v295, %v327
    %v344 = vadd.f32 %v296, %v328
    %v345 = vadd.f32 %v297, %v329
    %v346 = vadd.f32 %v298, %v330
    %v347 = vadd.f32 %v299, %v331
    %v348 = vadd.f32 %v300, %v332
    %v349 = vmax.f32 %v333, 0.0
    %v350 = vmax.f32 %v334, 0.0
    %v351 = vmax.f32 %v335, 0.0
    %v352 = vmax.f32 %v336, 0.0
    %v353 = vmax.f32 %v337, 0.0
    %v354 = vmax.f32 %v338, 0.0
    %v355 = vmax.f32 %v339, 0.0
    %v356 = vmax.f32 %v340, 0.0
    %v357 = vmax.f32 %v341, 0.0
    %v358 = vmax.f32 %v342, 0.0
    %v359 = vmax.f32 %v343, 0.0
    %v360 = vmax.f32 %v344, 0.0
    %v361 = vmax.f32 %v345, 0.0
    %v362 = vmax.f32 %v346, 0.0
    %v363 = vmax.f32 %v347, 0.0
    %v364 = vmax.f32 %v348, 0.0
    %v365 = vpack.c.bf16 %v349, %v349
    %v366 = vpack.c.bf16 %v350, %v350
    %v367 = vpack.c.bf16 %v351, %v351
    %v368 = vpack.c.bf16 %v352, %v352
    %v369 = vpack.c.bf16 %v353, %v353
    %v370 = vpack.c.bf16 %v354, %v354
    %v371 = vpack.c.bf16 %v355, %v355
    %v372 = vpack.c.bf16 %v356, %v356
    %v373 = vpack.c.bf16 %v357, %v357
    %v374 = vpack.c.bf16 %v358, %v358
    %v375 = vpack.c.bf16 %v359, %v359
    %v376 = vpack.c.bf16 %v360, %v360
    %v377 = vpack.c.bf16 %v361, %v361
    %v378 = vpack.c.bf16 %v362, %v362
    %v379 = vpack.c.bf16 %v363, %v363
    %v380 = vpack.c.bf16 %v364, %v364
    %381 = vst [vmem:[%s4] sm:$0xf] %v365
    %382 = vst [vmem:[%s4 + $0x4] sm:$0xf] %v366
    %383 = vst [vmem:[%s4 + $0x8] sm:$0xf] %v367
    %384 = vst [vmem:[%s4 + $0xc] sm:$0xf] %v368
    %385 = vst [vmem:[%s4 + $0x10] sm:$0xf] %v369
    %386 = vst [vmem:[%s4 + $0x14] sm:$0xf] %v370
    %387 = vst [vmem:[%s4 + $0x18] sm:$0xf] %v371
    %388 = vst [vmem:[%s4 + $0x1c] sm:$0xf] %v372
    %389 = vst [vmem:[%s4 + $0x20] sm:$0xf] %v373
    %390 = vst [vmem:[%s4 + $0x24] sm:$0xf] %v374
    %391 = vst [vmem:[%s4 + $0x28] sm:$0xf] %v375
    %392 = vst [vmem:[%s4 + $0x2c] sm:$0xf] %v376
    %393 = vst [vmem:[%s4 + $0x30] sm:$0xf] %v377
    %394 = vst [vmem:[%s4 + $0x34] sm:$0xf] %v378
    %395 = vst [vmem:[%s4 + $0x38] sm:$0xf] %v379
    %396 = vst [vmem:[%s4 + $0x3c] sm:$0xf] %v380
  $region25: #{basic_block_forward.5} parent=0 // pred_fallthru
    _
  // Predicated region
  $region26: #{basic_block_forward.5} parent=0 // pred_check
    _
  $region27: #{basic_block_forward.5} parent=0 // pred_check_branch
    %398 = sbr.rel (0) target = $region29
  $region28: #{basic_block_forward.5} parent=0 // pred_region
    _
  $region29: #{basic_block_forward.5} parent=0 // pred_fallthru
    _
  // Predicated region
  $region30: #{basic_block_forward.5} parent=0 // pred_check
    _
  $region31: #{basic_block_forward.5} parent=0 // pred_check_branch
    %400 = sbr.rel (0) target = $region33
  $region32: #{basic_block_forward.5} parent=0 // pred_region
    _
  $region33: #{basic_block_forward.5} parent=0 // pred_fallthru
    _

</llo_original>
